<compile_context>
chip_gen: v7x
topology: tpu7x:2x2x1
jax: 0.10.0
libtpu: 0.0.40
codegen_flags: <defaults>
</compile_context>

<pallas_src>
import math
from functools import partial

import jax
import jax.numpy as jnp
from jax.experimental import pallas as pl
from jax.experimental.pallas import tpu as pltpu


def embed_time_kernel(t_ref, const_ref, o_ref):
    """t_ref: (TB, 1) f32; const_ref: (2, Dp) f32 (row0=freq, row1=cos mask);
    o_ref: (TB, Dp) — single unmasked full-width store."""
    freq = const_ref[0:1, :]              # (1, Dp)
    is_cos = const_ref[1:2, :] > 0.5      # (1, Dp)
    arg = t_ref[...] * freq               # (TB, Dp) via lane broadcast
    # Exact sin/cos halves; both transcendentals ride the EUP slot, the select
    # is a cheap VPU op, and the result is one lane-dense store.
    out = jnp.where(is_cos, jnp.cos(arg), jnp.sin(arg))
    o_ref[...] = out.astype(o_ref.dtype)


def _round_up(x, m):
    return ((x + m - 1) // m) * m


@partial(jax.jit, static_argnames=("dim", "out_dtype", "block_b"))
def embed_time(time, dim, *, out_dtype=jnp.float32, block_b=None):
    """time: (B,) -> (B, dim); [:, :dim//2] = sin(t*f), [:, dim//2:] = cos(t*f)."""
    assert dim % 2 == 0, "EmbedTime requires an even dim"
    half_dim = dim // 2
    assert half_dim > 1, "EmbedTime requires dim >= 4 (half_dim - 1 > 0)"

    time = jnp.asarray(time, jnp.float32)
    b = time.shape[0]

    itemsize = jnp.dtype(out_dtype).itemsize
    sub = 8 if itemsize >= 4 else 16       # sublane multiple (16 for packed bf16)

    # Lane-dense output: pad feature dim to a multiple of 128 so every store is
    # an unmasked vst; padding is sliced off in the wrapper (free under jit).
    dim_pad = _round_up(dim, 128)

    if block_b is None:
        b_r = _round_up(b, sub)
        # Cap so the double-buffered output tile stays <= ~16 MiB on all chips
        # (v7x has only 64 MiB VMEM / 32 MiB scoped default); the (block_b, 1)
        # time tiles add ~2 * block_b/8 * 4 KiB of lane-padded VMEM on top.
        cap = max(sub, min(2048, ((8 << 20) // (dim_pad * itemsize)) // sub * sub))
        if b_r <= sub:
            block_b = sub
        else:
            # >= 2 grid steps so ("parallel",) shards the batch across both v7x
            # TensorCores; no-op on single-TC v5e/v6e.
            block_b = min(_round_up(pl.cdiv(b_r, 2), sub), cap)
    assert block_b % sub == 0

    b_pad = pl.cdiv(b, block_b) * block_b
    t2d = time.reshape(b, 1)
    if b_pad != b:
        t2d = jnp.pad(t2d, ((0, b_pad - b), (0, 0)))

    # Single merged constant (2, dim_pad), hoisted & constant-folded under jit:
    #   row 0: frequency table tiled over both halves (zeros in lane padding)
    #   row 1: cos-half selector mask.
    scale = math.log(10000.0) / (half_dim - 1)
    freqs = jnp.exp(jnp.arange(half_dim, dtype=jnp.float32) * -scale)
    pad = jnp.zeros((dim_pad - dim,), jnp.float32)
    freq_full = jnp.concatenate([freqs, freqs, pad]).reshape(1, dim_pad)
    mask = jnp.concatenate(
        [jnp.zeros((half_dim,), jnp.float32),
         jnp.ones((half_dim,), jnp.float32),
         pad]).reshape(1, dim_pad)
    const = jnp.concatenate([freq_full, mask], axis=0)        # (2, dim_pad)

    out = pl.pallas_call(
        embed_time_kernel,
        out_shape=jax.ShapeDtypeStruct((b_pad, dim_pad), out_dtype),
        grid_spec=pltpu.PrefetchScalarGridSpec(
            num_scalar_prefetch=0,
            grid=(b_pad // block_b,),
            in_specs=[
                pl.BlockSpec((block_b, 1), lambda i: (i, 0)),
                pl.BlockSpec((2, dim_pad), lambda i: (0, 0)),  # constant block
            ],
            out_specs=pl.BlockSpec((block_b, dim_pad), lambda i: (i, 0)),
        ),
        compiler_params=pltpu.CompilerParams(
            dimension_semantics=("parallel",),
        ),
    )(t2d, const)
    return out[:b, :dim]


def embed_time_ref(time, dim):
    """Pure-JAX reference mirroring the PyTorch forward."""
    time = jnp.asarray(time, jnp.float32)
    half_dim = dim // 2
    emb = math.log(10000.0) / (half_dim - 1)
    emb = jnp.exp(jnp.arange(half_dim, dtype=jnp.float32) * -emb)
    emb = time[:, None] * emb[None, :]
    return jnp.concatenate([jnp.sin(emb), jnp.cos(emb)], axis=-1)


if __name__ == "__main__":
    key = jax.random.PRNGKey(0)
    k0, k1 = jax.random.split(key)

    # Lane-aligned halves (half_dim = 128) -> pure unmasked stores.
    B, DIM = 8, 256
    time = jax.random.uniform(k0, (B,), jnp.float32, minval=0.0, maxval=1000.0)
    out = jax.block_until_ready(embed_time(time, DIM))
    ref = embed_time_ref(time, DIM)
    assert out.shape == (B, DIM)
    assert jnp.allclose(out, ref, atol=1e-4, rtol=1e-4), "mismatch vs reference"

    # Non-lane-aligned dim + non-multiple-of-8 batch (exercise padding paths).
    B2, DIM2 = 5, 32
    time2 = jax.random.uniform(k1, (B2,), jnp.float32, minval=0.0, maxval=1000.0)
    out2 = jax.block_until_ready(embed_time(time2, DIM2))
    ref2 = embed_time_ref(time2, DIM2)
    assert out2.shape == (B2, DIM2)
    assert jnp.allclose(out2, ref2, atol=1e-4, rtol=1e-4), "mismatch vs reference"

    # bf16 output path (store-bandwidth win on v5e/v6e); sublane multiple -> 16.
    out3 = jax.block_until_ready(embed_time(time, DIM, out_dtype=jnp.bfloat16))
    assert out3.shape == (B, DIM)
    assert jnp.allclose(out3.astype(jnp.float32), ref, atol=2e-2, rtol=2e-2), \
        "bf16 mismatch vs reference"

    print("KERNEL_OK")
</pallas_src>

<mosaic_0001>
module attributes {stable_mosaic.version = 11 : i64} {
  func.func @embed_time_kernel(%arg0: i32, %arg1: memref<8x1xf32, #tpu.memory_space<vmem>>, %arg2: memref<2x256xf32, #tpu.memory_space<vmem>>, %arg3: memref<8x256xf32, #tpu.memory_space<vmem>>) attributes {dimension_semantics = [#tpu.dimension_semantics<parallel>], iteration_bounds = array<i64: 1>, scalar_prefetch = 0 : i64, scratch_operands = 0 : i64, tpu.core_type = #tpu.core_type<tc>, window_params = [{transform_indices = @transform_0, window_bounds = array<i64: 8, 1>}, {pipeline_mode = #tpu.pipeline_mode<synchronous>, transform_indices = @transform_1, window_bounds = array<i64: 2, 256>}, {transform_indices = @transform_2, window_bounds = array<i64: 8, 256>}]} {
    %c0 = arith.constant 0 : index
    %c0_0 = arith.constant 0 : index
    %0 = vector.load %arg2[%c0, %c0_0] : memref<2x256xf32, #tpu.memory_space<vmem>>, vector<1x256xf32>
    %c1 = arith.constant 1 : index
    %c0_1 = arith.constant 0 : index
    %1 = vector.load %arg2[%c1, %c0_1] : memref<2x256xf32, #tpu.memory_space<vmem>>, vector<1x256xf32>
    %cst = arith.constant 5.000000e-01 : f32
    %2 = vector.broadcast %cst : f32 to vector<1x256xf32>
    %3 = arith.cmpf ogt, %1, %2 : vector<1x256xf32>
    %c0_2 = arith.constant 0 : index
    %c0_3 = arith.constant 0 : index
    %4 = vector.load %arg1[%c0_2, %c0_3] : memref<8x1xf32, #tpu.memory_space<vmem>>, vector<8x1xf32>
    %5 = vector.broadcast %4 : vector<8x1xf32> to vector<8x256xf32>
    %6 = vector.broadcast %0 : vector<1x256xf32> to vector<8x256xf32>
    %7 = arith.mulf %5, %6 : vector<8x256xf32>
    %8 = math.cos %7 : vector<8x256xf32>
    %9 = math.sin %7 : vector<8x256xf32>
    %10 = vector.shape_cast %3 : vector<1x256xi1> to vector<1x256xi1>
    %11 = vector.broadcast %10 : vector<1x256xi1> to vector<8x256xi1>
    %12 = arith.select %11, %8, %9 : vector<8x256xi1>, vector<8x256xf32>
    %c0_4 = arith.constant 0 : index
    %c0_5 = arith.constant 0 : index
    %13 = vector.load %arg3[%c0_4, %c0_5] : memref<8x256xf32, #tpu.memory_space<vmem>>, vector<8x256xf32>
    tpu.vector_store %arg3[%c0_4, %c0_5], %12 {strides = array<i32>} : memref<8x256xf32, #tpu.memory_space<vmem>>, vector<8x256xf32>,
    return
  }
  func.func @transform_0(%arg0: i32) -> (i32, i32) {
    %c0_i32 = arith.constant 0 : i32
    %c0_i32_0 = arith.constant 0 : i32
    return %arg0, %c0_i32 : i32, i32
  }
  func.func @transform_1(%arg0: i32) -> (i32, i32) {
    %c0_i32 = arith.constant 0 : i32
    %c0_i32_0 = arith.constant 0 : i32
    %c0_i32_1 = arith.constant 0 : i32
    return %c0_i32, %c0_i32_0 : i32, i32
  }
  func.func @transform_2(%arg0: i32) -> (i32, i32) {
    %c0_i32 = arith.constant 0 : i32
    %c0_i32_0 = arith.constant 0 : i32
    return %arg0, %c0_i32 : i32, i32
  }
}

</mosaic_0001>

<llo_original>
// kernel: embed_time.1
$region0: #{embed_time.1}
  #allocation0 [shape = 'u32[]', space=smem, size = 0x4, offset = 0x4, fixed_abs, tag = 'smem constant byte address 0x4 - core index']
  #allocation1 [shape = 'u32[144,128]{1,0:T(1,128)}', space=vmem, size = 0x12000, scoped, tag = 'internal scratch']
  %s0 = inlined_call_operand.vmem [shape: f32[8,1], index: 0, kind: input, shape index: {}]
  %s1 = inlined_call_operand.vmem [shape: f32[2,256], index: 1, kind: input, shape index: {}]
  %s2 = inlined_call_operand.hbm [shape: f32[8,256], index: 2, kind: output, shape index: {}]
  %s3 = sld [smem:[#allocation0]]
  $region18: #{embed_time.1} parent=0
    _
  %s5 = ssub.s32 1, %s3
  %s6 = scalar_select 0, %s5, %s3
  $region1: #{embed_time.1} parent=0
    #allocation2 [shape = 'u8[8192]{0}', space=vmem, size = 0x2000, scoped, tag = 'output window, operand 0, single buffered']
    #allocation3 [shape = 's32[1]{0}', space=sflag, size = 0x4, scoped, tag = 'scoped memory for embed_time.1']
    %7 = vsyncpa [#allocation3], 0
    // Predicated region
    $region2: #{embed_time.1} parent=1 // pred_check
      _
    $region3: #{embed_time.1} parent=1 // pred_check_branch
      %9 = sbr.rel (0) target = $region5
    $region4: #{embed_time.1} parent=1 // pred_region
      _
    $region5: #{embed_time.1} parent=1 // pred_fallthru
      _
    // Predicated region
    $region6: #{embed_time.1} parent=1 // pred_check
      _
    $region7: #{embed_time.1} parent=1 // pred_check_branch
      %11 = sbr.rel (0) target = $region9
    $region8: #{embed_time.1} parent=1 // pred_region
      _
    $region9: #{embed_time.1} parent=1 // pred_fallthru
      _
    %v12 = vld [vmem:[%s1] ss:$2 sm:$0x3]
    %s13 = scalar_lea.vmem %s1, 1
    %v14 = vld [vmem:[%s13] ss:$2 sm:$0x3]
    %vm15 = vcmp.gt.f32.partialorder %v14, 0.5
    %v16 = vld [vmem:[%s0] sm:$0xff]
    %18 = vset.pattern.permute.xlu0 0
    %19 = vperm.xlu0 %18, %v16
    %v20 = vpop.permute.xlu0 %19
    %v23 = vlaneseq
    %v24 = vshrl.u32 %v23, 7
    %v25 = vsub.s32 0, %v24
    %v26 = vrot.slane %v12, %v25
    %v27 = vlaneseq
    %v28 = vshrl.u32 %v27, 7
    %v29 = vsub.s32 1, %v28
    %v30 = vrot.slane %v12, %v29
    %v33 = vmul.f32 %v20, %v26
    %v34 = vmul.f32 %v20, %v30
    %v35 = vand.u32 2147483647, %v33
    %vm36 = vcmp.le.f32.partialorder %v35, 0.7853982
    %vm37 = vcmp.lt.s32.totalorder %v33, 0
    %v38 = vand.u32 %v33, 2139095040
    %v39 = vshrl.u32 %v38, 23
    %v40 = vsub.s32 %v39, 127
    %v41 = vand.u32 2147483647, %v33
    %v42 = vand.u32 %v41, 8388607
    %v43 = vor.u32 %v42, 8388608
    %v44 = vsub.s32 0, %v43
    %v45 = vadd.s32 %v40, 1
    %vm46 = vcmp.gt.s32.totalorder %v45, 0
    %v47 = vsel %vm46, %v45, 0
    %v48 = vshrl.u32 %v47, 5
    %v49 = vand.u32 %v47, 31
    %v50 = vsub.s32 32, %v49
    %v51 = vshrl.u32 683565275, %v50
    %v52 = vshll.u32 683565275, %v49
    %v53 = vshrl.u32 2475754826, %v50
    %v54 = vor.u32 %v52, %v53
    %v55 = vshll.u32 2475754826, %v49
    %v56 = vshrl.u32 2131351028, %v50
    %v57 = vor.u32 %v55, %v56
    %v58 = vshll.u32 2131351028, %v49
    %v59 = vshrl.u32 2102212464, %v50
    %v60 = vor.u32 %v58, %v59
    %v61 = vshll.u32 2102212464, %v49
    %v62 = vshrl.u32 920167782, %v50
    %v63 = vor.u32 %v61, %v62
    %v64 = vshll.u32 920167782, %v49
    %v65 = vshrl.u32 1326507024, %v50
    %v66 = vor.u32 %v64, %v65
    %vm67 = vcmp.lt.s32.totalorder %v48, 1
    %vm68 = vcmp.lt.s32.totalorder %v48, 2
    %vm69 = vcmp.lt.s32.totalorder %v48, 3
    %vm70 = vcmp.lt.s32.totalorder %v48, 4
    %v71 = vsel %vm67, %v51, %v54
    %v72 = vsel %vm70, %v60, 2102212464
    %v73 = vsel %vm69, %v57, %v72
    %v74 = vsel %vm68, %v71, %v73
    %v75 = vsel %vm67, %v54, %v57
    %v76 = vsel %vm70, %v63, 920167782
    %v77 = vsel %vm69, %v60, %v76
    %v78 = vsel %vm68, %v75, %v77
    %v79 = vsel %vm67, %v57, %v60
    %v80 = vsel %vm70, %v66, 1326507024
    %v81 = vsel %vm69, %v63, %v80
    %v82 = vsel %vm68, %v79, %v81
    %v83 = vshll.u32 %v43, 8
    %v84 = vmul.u32.u64.compose %v83, %v82
    %v85 = vextract.low.u32 %v84
    %v86 = vextract.high.u32 %v84
    %v87 = vmul.u32.u64.compose %v83, %v78
    %v88 = vextract.low.u32 %v87
    %v89 = vextract.high.u32 %v87
    %v90 = vmul.u32 %v83, %v74
    %v91 = vadd.s32 %v86, %v88
    %vm92 = vc.u32 %v86, %v88
    %v93 = vadd.s32 %v89, 1
    %v94 = vsel %vm92, %v93, %v89
    %v95 = vadd.s32 %v90, %v94
    %v96 = vadd.s32 %v95, 536870912
    %v97 = vshrl.u32 %v96, 30
    %v98 = vshll.u32 %v97, 30
    %v99 = vsub.s32 %v95, %v98
    %vm100 = vcmp.lt.s32.totalorder %v99, 0
    %v101 = vsub.s32 0, %v99
    %v102 = vsel %vm100, %v101, %v99
    %v103 = vclz %v102
    %v104 = vsub.s32 %v103, 2
    %vm105 = vcmp.gt.s32.totalorder 0, %v104
    %v106 = vsel %vm105, 0, %v104
    %v107 = vsub.s32 32, %v106
    %v108 = vshll.u32 %v99, %v106
    %v109 = vshrl.u32 %v91, %v107
    %v110 = vor.u32 %v108, %v109
    %v111 = vsub.s32 4294967266, %v106
    %v112 = vadd.s32 %v111, 127
    %v113 = vshll.u32 %v112, 23
    %v114 = vor.u32 4788187, %v113
    %v115 = vand.u32 2147483647, %v114
    %v117 = vcvt.s32.f32 %v110
    %v118 = vmul.f32 %v117, %v115
    %v119 = vxor.u32 %v118, 2147483648
    %v120 = vsel %vm37, %v119, %v118
    %v121 = vsub.s32 4, %v97
    %v122 = vsel %vm37, %v121, %v97
    %v123 = vsel %vm36, %v33, %v120
    %v124 = vsel %vm36, 0, %v122
    %v125 = vcosq.f32.pop %v123
    %v126 = vsinq.f32.pop %v123
    %vm127 = vweird.f32 %v33
    %v128 = vand.u32 %v124, 3
    %vm129 = vcmp.lt.s32.totalorder %v128, 2
    %vm130 = vcmp.eq.s32.totalorder %v128, 0
    %v131 = vxor.u32 %v126, 2147483648
    %v132 = vsel %vm130, %v125, %v131
    %vm133 = vcmp.eq.s32.totalorder %v128, 2
    %v134 = vxor.u32 %v125, 2147483648
    %v135 = vsel %vm133, %v134, %v126
    %v136 = vsel %vm129, %v132, %v135
    %v137 = vsel %vm127, nan, %v136
    %v138 = vand.u32 2147483647, %v34
    %vm139 = vcmp.le.f32.partialorder %v138, 0.7853982
    %vm140 = vcmp.lt.s32.totalorder %v34, 0
    %v141 = vand.u32 %v34, 2139095040
    %v142 = vshrl.u32 %v141, 23
    %v143 = vsub.s32 %v142, 127
    %v144 = vand.u32 2147483647, %v34
    %v145 = vand.u32 %v144, 8388607
    %v146 = vor.u32 %v145, 8388608
    %v147 = vsub.s32 0, %v146
    %v148 = vadd.s32 %v143, 1
    %vm149 = vcmp.gt.s32.totalorder %v148, 0
    %v150 = vsel %vm149, %v148, 0
    %v151 = vshrl.u32 %v150, 5
    %v152 = vand.u32 %v150, 31
    %v153 = vsub.s32 32, %v152
    %v154 = vshrl.u32 683565275, %v153
    %v155 = vshll.u32 683565275, %v152
    %v156 = vshrl.u32 2475754826, %v153
    %v157 = vor.u32 %v155, %v156
    %v158 = vshll.u32 2475754826, %v152
    %v159 = vshrl.u32 2131351028, %v153
    %v160 = vor.u32 %v158, %v159
    %v161 = vshll.u32 2131351028, %v152
    %v162 = vshrl.u32 2102212464, %v153
    %v163 = vor.u32 %v161, %v162
    %v164 = vshll.u32 2102212464, %v152
    %v165 = vshrl.u32 920167782, %v153
    %v166 = vor.u32 %v164, %v165
    %v167 = vshll.u32 920167782, %v152
    %v168 = vshrl.u32 1326507024, %v153
    %v169 = vor.u32 %v167, %v168
    %vm170 = vcmp.lt.s32.totalorder %v151, 1
    %vm171 = vcmp.lt.s32.totalorder %v151, 2
    %vm172 = vcmp.lt.s32.totalorder %v151, 3
    %vm173 = vcmp.lt.s32.totalorder %v151, 4
    %v174 = vsel %vm170, %v154, %v157
    %v175 = vsel %vm173, %v163, 2102212464
    %v176 = vsel %vm172, %v160, %v175
    %v177 = vsel %vm171, %v174, %v176
    %v178 = vsel %vm170, %v157, %v160
    %v179 = vsel %vm173, %v166, 920167782
    %v180 = vsel %vm172, %v163, %v179
    %v181 = vsel %vm171, %v178, %v180
    %v182 = vsel %vm170, %v160, %v163
    %v183 = vsel %vm173, %v169, 1326507024
    %v184 = vsel %vm172, %v166, %v183
    %v185 = vsel %vm171, %v182, %v184
    %v186 = vshll.u32 %v146, 8
    %v187 = vmul.u32.u64.compose %v186, %v185
    %v188 = vextract.low.u32 %v187
    %v189 = vextract.high.u32 %v187
    %v190 = vmul.u32.u64.compose %v186, %v181
    %v191 = vextract.low.u32 %v190
    %v192 = vextract.high.u32 %v190
    %v193 = vmul.u32 %v186, %v177
    %v194 = vadd.s32 %v189, %v191
    %vm195 = vc.u32 %v189, %v191
    %v196 = vadd.s32 %v192, 1
    %v197 = vsel %vm195, %v196, %v192
    %v198 = vadd.s32 %v193, %v197
    %v199 = vadd.s32 %v198, 536870912
    %v200 = vshrl.u32 %v199, 30
    %v201 = vshll.u32 %v200, 30
    %v202 = vsub.s32 %v198, %v201
    %vm203 = vcmp.lt.s32.totalorder %v202, 0
    %v204 = vsub.s32 0, %v202
    %v205 = vsel %vm203, %v204, %v202
    %v206 = vclz %v205
    %v207 = vsub.s32 %v206, 2
    %vm208 = vcmp.gt.s32.totalorder 0, %v207
    %v209 = vsel %vm208, 0, %v207
    %v210 = vsub.s32 32, %v209
    %v211 = vshll.u32 %v202, %v209
    %v212 = vshrl.u32 %v194, %v210
    %v213 = vor.u32 %v211, %v212
    %v214 = vsub.s32 4294967266, %v209
    %v215 = vadd.s32 %v214, 127
    %v216 = vshll.u32 %v215, 23
    %v217 = vor.u32 4788187, %v216
    %v218 = vand.u32 2147483647, %v217
    %v220 = vcvt.s32.f32 %v213
    %v221 = vmul.f32 %v220, %v218
    %v222 = vxor.u32 %v221, 2147483648
    %v223 = vsel %vm140, %v222, %v221
    %v224 = vsub.s32 4, %v200
    %v225 = vsel %vm140, %v224, %v200
    %v226 = vsel %vm139, %v34, %v223
    %v227 = vsel %vm139, 0, %v225
    %v228 = vcosq.f32.pop %v226
    %v229 = vsinq.f32.pop %v226
    %vm230 = vweird.f32 %v34
    %v231 = vand.u32 %v227, 3
    %vm232 = vcmp.lt.s32.totalorder %v231, 2
    %vm233 = vcmp.eq.s32.totalorder %v231, 0
    %v234 = vxor.u32 %v229, 2147483648
    %v235 = vsel %vm233, %v228, %v234
    %vm236 = vcmp.eq.s32.totalorder %v231, 2
    %v237 = vxor.u32 %v228, 2147483648
    %v238 = vsel %vm236, %v237, %v229
    %v239 = vsel %vm232, %v235, %v238
    %v240 = vsel %vm230, nan, %v239
    %v241 = vand.u32 2147483647, %v33
    %vm242 = vcmp.le.f32.partialorder %v241, 0.7853982
    %vm243 = vcmp.lt.s32.totalorder %v33, 0
    %v244 = vand.u32 %v33, 2139095040
    %v245 = vshrl.u32 %v244, 23
    %v246 = vsub.s32 %v245, 127
    %v247 = vand.u32 2147483647, %v33
    %v248 = vand.u32 %v247, 8388607
    %v249 = vor.u32 %v248, 8388608
    %v250 = vsub.s32 0, %v249
    %v251 = vadd.s32 %v246, 1
    %vm252 = vcmp.gt.s32.totalorder %v251, 0
    %v253 = vsel %vm252, %v251, 0
    %v254 = vshrl.u32 %v253, 5
    %v255 = vand.u32 %v253, 31
    %v256 = vsub.s32 32, %v255
    %v257 = vshrl.u32 683565275, %v256
    %v258 = vshll.u32 683565275, %v255
    %v259 = vshrl.u32 2475754826, %v256
    %v260 = vor.u32 %v258, %v259
    %v261 = vshll.u32 2475754826, %v255
    %v262 = vshrl.u32 2131351028, %v256
    %v263 = vor.u32 %v261, %v262
    %v264 = vshll.u32 2131351028, %v255
    %v265 = vshrl.u32 2102212464, %v256
    %v266 = vor.u32 %v264, %v265
    %v267 = vshll.u32 2102212464, %v255
    %v268 = vshrl.u32 920167782, %v256
    %v269 = vor.u32 %v267, %v268
    %v270 = vshll.u32 920167782, %v255
    %v271 = vshrl.u32 1326507024, %v256
    %v272 = vor.u32 %v270, %v271
    %vm273 = vcmp.lt.s32.totalorder %v254, 1
    %vm274 = vcmp.lt.s32.totalorder %v254, 2
    %vm275 = vcmp.lt.s32.totalorder %v254, 3
    %vm276 = vcmp.lt.s32.totalorder %v254, 4
    %v277 = vsel %vm273, %v257, %v260
    %v278 = vsel %vm276, %v266, 2102212464
    %v279 = vsel %vm275, %v263, %v278
    %v280 = vsel %vm274, %v277, %v279
    %v281 = vsel %vm273, %v260, %v263
    %v282 = vsel %vm276, %v269, 920167782
    %v283 = vsel %vm275, %v266, %v282
    %v284 = vsel %vm274, %v281, %v283
    %v285 = vsel %vm273, %v263, %v266
    %v286 = vsel %vm276, %v272, 1326507024
    %v287 = vsel %vm275, %v269, %v286
    %v288 = vsel %vm274, %v285, %v287
    %v289 = vshll.u32 %v249, 8
    %v290 = vmul.u32.u64.compose %v289, %v288
    %v291 = vextract.low.u32 %v290
    %v292 = vextract.high.u32 %v290
    %v293 = vmul.u32.u64.compose %v289, %v284
    %v294 = vextract.low.u32 %v293
    %v295 = vextract.high.u32 %v293
    %v296 = vmul.u32 %v289, %v280
    %v297 = vadd.s32 %v292, %v294
    %vm298 = vc.u32 %v292, %v294
    %v299 = vadd.s32 %v295, 1
    %v300 = vsel %vm298, %v299, %v295
    %v301 = vadd.s32 %v296, %v300
    %v302 = vadd.s32 %v301, 536870912
    %v303 = vshrl.u32 %v302, 30
    %v304 = vshll.u32 %v303, 30
    %v305 = vsub.s32 %v301, %v304
    %vm306 = vcmp.lt.s32.totalorder %v305, 0
    %v307 = vsub.s32 0, %v305
    %v308 = vsel %vm306, %v307, %v305
    %v309 = vclz %v308
    %v310 = vsub.s32 %v309, 2
    %vm311 = vcmp.gt.s32.totalorder 0, %v310
    %v312 = vsel %vm311, 0, %v310
    %v313 = vsub.s32 32, %v312
    %v314 = vshll.u32 %v305, %v312
    %v315 = vshrl.u32 %v297, %v313
    %v316 = vor.u32 %v314, %v315
    %v317 = vsub.s32 4294967266, %v312
    %v318 = vadd.s32 %v317, 127
    %v319 = vshll.u32 %v318, 23
    %v320 = vor.u32 4788187, %v319
    %v321 = vand.u32 2147483647, %v320
    %v323 = vcvt.s32.f32 %v316
    %v324 = vmul.f32 %v323, %v321
    %v325 = vxor.u32 %v324, 2147483648
    %v326 = vsel %vm243, %v325, %v324
    %v327 = vsub.s32 4, %v303
    %v328 = vsel %vm243, %v327, %v303
    %v329 = vsel %vm242, %v33, %v326
    %v330 = vsel %vm242, 0, %v328
    %v331 = vcosq.f32.pop %v329
    %v332 = vsinq.f32.pop %v329
    %vm333 = vweird.f32 %v33
    %v334 = vadd.s32 %v330, 3
    %v335 = vand.u32 %v334, 3
    %vm336 = vcmp.lt.s32.totalorder %v335, 2
    %vm337 = vcmp.eq.s32.totalorder %v335, 0
    %v338 = vxor.u32 %v332, 2147483648
    %v339 = vsel %vm337, %v331, %v338
    %vm340 = vcmp.eq.s32.totalorder %v335, 2
    %v341 = vxor.u32 %v331, 2147483648
    %v342 = vsel %vm340, %v341, %v332
    %v343 = vsel %vm336, %v339, %v342
    %v344 = vsel %vm333, nan, %v343
    %v345 = vand.u32 2147483647, %v34
    %vm346 = vcmp.le.f32.partialorder %v345, 0.7853982
    %vm347 = vcmp.lt.s32.totalorder %v34, 0
    %v348 = vand.u32 %v34, 2139095040
    %v349 = vshrl.u32 %v348, 23
    %v350 = vsub.s32 %v349, 127
    %v351 = vand.u32 2147483647, %v34
    %v352 = vand.u32 %v351, 8388607
    %v353 = vor.u32 %v352, 8388608
    %v354 = vsub.s32 0, %v353
    %v355 = vadd.s32 %v350, 1
    %vm356 = vcmp.gt.s32.totalorder %v355, 0
    %v357 = vsel %vm356, %v355, 0
    %v358 = vshrl.u32 %v357, 5
    %v359 = vand.u32 %v357, 31
    %v360 = vsub.s32 32, %v359
    %v361 = vshrl.u32 683565275, %v360
    %v362 = vshll.u32 683565275, %v359
    %v363 = vshrl.u32 2475754826, %v360
    %v364 = vor.u32 %v362, %v363
    %v365 = vshll.u32 2475754826, %v359
    %v366 = vshrl.u32 2131351028, %v360
    %v367 = vor.u32 %v365, %v366
    %v368 = vshll.u32 2131351028, %v359
    %v369 = vshrl.u32 2102212464, %v360
    %v370 = vor.u32 %v368, %v369
    %v371 = vshll.u32 2102212464, %v359
    %v372 = vshrl.u32 920167782, %v360
    %v373 = vor.u32 %v371, %v372
    %v374 = vshll.u32 920167782, %v359
    %v375 = vshrl.u32 1326507024, %v360
    %v376 = vor.u32 %v374, %v375
    %vm377 = vcmp.lt.s32.totalorder %v358, 1
    %vm378 = vcmp.lt.s32.totalorder %v358, 2
    %vm379 = vcmp.lt.s32.totalorder %v358, 3
    %vm380 = vcmp.lt.s32.totalorder %v358, 4
    %v381 = vsel %vm377, %v361, %v364
    %v382 = vsel %vm380, %v370, 2102212464
    %v383 = vsel %vm379, %v367, %v382
    %v384 = vsel %vm378, %v381, %v383
    %v385 = vsel %vm377, %v364, %v367
    %v386 = vsel %vm380, %v373, 920167782
    %v387 = vsel %vm379, %v370, %v386
    %v388 = vsel %vm378, %v385, %v387
    %v389 = vsel %vm377, %v367, %v370
    %v390 = vsel %vm380, %v376, 1326507024
    %v391 = vsel %vm379, %v373, %v390
    %v392 = vsel %vm378, %v389, %v391
    %v393 = vshll.u32 %v353, 8
    %v394 = vmul.u32.u64.compose %v393, %v392
    %v395 = vextract.low.u32 %v394
    %v396 = vextract.high.u32 %v394
    %v397 = vmul.u32.u64.compose %v393, %v388
    %v398 = vextract.low.u32 %v397
    %v399 = vextract.high.u32 %v397
    %v400 = vmul.u32 %v393, %v384
    %v401 = vadd.s32 %v396, %v398
    %vm402 = vc.u32 %v396, %v398
    %v403 = vadd.s32 %v399, 1
    %v404 = vsel %vm402, %v403, %v399
    %v405 = vadd.s32 %v400, %v404
    %v406 = vadd.s32 %v405, 536870912
    %v407 = vshrl.u32 %v406, 30
    %v408 = vshll.u32 %v407, 30
    %v409 = vsub.s32 %v405, %v408
    %vm410 = vcmp.lt.s32.totalorder %v409, 0
    %v411 = vsub.s32 0, %v409
    %v412 = vsel %vm410, %v411, %v409
    %v413 = vclz %v412
    %v414 = vsub.s32 %v413, 2
    %vm415 = vcmp.gt.s32.totalorder 0, %v414
    %v416 = vsel %vm415, 0, %v414
    %v417 = vsub.s32 32, %v416
    %v418 = vshll.u32 %v409, %v416
    %v419 = vshrl.u32 %v401, %v417
    %v420 = vor.u32 %v418, %v419
    %v421 = vsub.s32 4294967266, %v416
    %v422 = vadd.s32 %v421, 127
    %v423 = vshll.u32 %v422, 23
    %v424 = vor.u32 4788187, %v423
    %v425 = vand.u32 2147483647, %v424
    %v427 = vcvt.s32.f32 %v420
    %v428 = vmul.f32 %v427, %v425
    %v429 = vxor.u32 %v428, 2147483648
    %v430 = vsel %vm347, %v429, %v428
    %v431 = vsub.s32 4, %v407
    %v432 = vsel %vm347, %v431, %v407
    %v433 = vsel %vm346, %v34, %v430
    %v434 = vsel %vm346, 0, %v432
    %v435 = vcosq.f32.pop %v433
    %v436 = vsinq.f32.pop %v433
    %vm437 = vweird.f32 %v34
    %v438 = vadd.s32 %v434, 3
    %v439 = vand.u32 %v438, 3
    %vm440 = vcmp.lt.s32.totalorder %v439, 2
    %vm441 = vcmp.eq.s32.totalorder %v439, 0
    %v442 = vxor.u32 %v436, 2147483648
    %v443 = vsel %vm441, %v435, %v442
    %vm444 = vcmp.eq.s32.totalorder %v439, 2
    %v445 = vxor.u32 %v435, 2147483648
    %v446 = vsel %vm444, %v445, %v436
    %v447 = vsel %vm440, %v443, %v446
    %v448 = vsel %vm437, nan, %v447
    %v449 = vsel %vm15, 1, 0
    %v450 = vlaneseq
    %v451 = vshrl.u32 %v450, 7
    %v452 = vsub.s32 0, %v451
    %v453 = vrot.slane %v449, %v452
    %v454 = vlaneseq
    %v455 = vshrl.u32 %v454, 7
    %v456 = vsub.s32 1, %v455
    %v457 = vrot.slane %v449, %v456
    %vm458 = vcmp.eq.s32.totalorder %v453, 1
    %vm459 = vcmp.eq.s32.totalorder %v457, 1
    %v460 = vsel %vm458, %v137, %v344
    %v461 = vsel %vm459, %v240, %v448
    %462 = vst [vmem:[#allocation2] sm:$0xff] %v460
    %463 = vst [vmem:[#allocation2 + $0x8] sm:$0xff] %v461
    // Predicated region
    $region10: #{embed_time.1} parent=1 // pred_check
      _
    $region11: #{embed_time.1} parent=1 // pred_check_branch
      %465 = sbr.rel (0) target = $region13
    $region12: #{embed_time.1} parent=1 // pred_region
      %s467 = ssub.s32 256, 256
      %468 = vsyncadd [#allocation3], %s467
      %s470 = sshll.u32 [#allocation2], 4
      %s471 = int_to_ptr.vmem [resolvable:$true] %s470
      %473 = dma.vmem_to_hbm [thread:$0]  %s471, 256, %s2, [#allocation3]
    $region13: #{embed_time.1} parent=1 // pred_fallthru
      _
    // Predicated region
    $region14: #{embed_time.1} parent=1 // pred_check
      _
    $region15: #{embed_time.1} parent=1 // pred_check_branch
      %475 = sbr.rel (0) target = $region17
    $region16: #{embed_time.1} parent=1 // pred_region
      %476 = dma.done [#allocation3], 256
    $region17: #{embed_time.1} parent=1 // pred_fallthru
      _
    %477 = vsyncpa [#allocation3], 1

</llo_original>
